<compile_context>
chip_gen: v7x
topology: tpu7x:2x2x1
jax: 0.10.0
libtpu: 0.0.40
codegen_flags: <defaults>
</compile_context>

<pallas_src>
import functools

import jax
import jax.numpy as jnp
from jax.experimental import pallas as pl
from jax.experimental.pallas import tpu as pltpu


# ---------------------------------------------------------------------------
# Kernel: fused twin-Q MLP. All 4 (fused) matmuls + ReLUs in one body.
# ---------------------------------------------------------------------------
def _critic_kernel(sa_ref, w1_ref, w2_ref, w3_ref, w4_ref, bias_ref, q_ref,
                   *, H, H2):
    f32 = jnp.float32

    # Layer 1: sa @ [w1 | w5]                                  -> (B, 2H)
    h = jnp.dot(sa_ref[...], w1_ref[...], preferred_element_type=f32)
    h = jnp.maximum(h + bias_ref[0:1, : 2 * H], 0.0)

    # Layer 2: block_diag(w2, w6)                              -> (B, 2H2)
    h = jnp.dot(h, w2_ref[...], preferred_element_type=f32)
    h = jnp.maximum(h + bias_ref[1:2, : 2 * H2], 0.0)

    # Layer 3: block_diag(w3, w7)                              -> (B, 2H)
    h = jnp.dot(h, w3_ref[...], preferred_element_type=f32)
    h = jnp.maximum(h + bias_ref[2:3, : 2 * H], 0.0)

    # Layer 4: block_diag(w4, w8) zero-padded to 128 lanes     -> (B, 128)
    # (cols 0/1 = q1/q2; cols 2..127 are exact zeros)
    q_ref[...] = (jnp.dot(h, w4_ref[...], preferred_element_type=f32)
                  + bias_ref[3:4, :])


# ---------------------------------------------------------------------------
# Parameter fusion (done once, outside the hot path)
# ---------------------------------------------------------------------------
def _block_diag(a, b):
    za = jnp.zeros((a.shape[0], b.shape[1]), a.dtype)
    zb = jnp.zeros((b.shape[0], a.shape[1]), a.dtype)
    return jnp.concatenate(
        [jnp.concatenate([a, za], axis=1),
         jnp.concatenate([zb, b], axis=1)], axis=0)


_OUT_LANES = 128  # lane-dense output width


def fuse_critic_params(params):
    """Fold the twin-Q heads into block-diagonal weights + one packed bias."""
    H = int(params["w1"].shape[1])
    H2 = int(params["w2"].shape[1])

    w4f = _block_diag(params["w4"], params["w8"])            # (2H, 2)
    w4f = jnp.pad(w4f, ((0, 0), (0, _OUT_LANES - w4f.shape[1])))  # (2H, 128)

    def pad_row(b):
        return jnp.pad(b, ((0, 0), (0, _OUT_LANES - b.shape[1])))

    fused = {
        "w1": jnp.concatenate([params["w1"], params["w5"]], axis=1),  # (S+A, 2H)
        "w2": _block_diag(params["w2"], params["w6"]),                # (2H, 2H2)
        "w3": _block_diag(params["w3"], params["w7"]),                # (2H2, 2H)
        "w4": w4f,                                                    # (2H, 128)
        "bias": jnp.concatenate([
            pad_row(jnp.concatenate([params["b1"], params["b5"]], axis=1)),
            pad_row(jnp.concatenate([params["b2"], params["b6"]], axis=1)),
            pad_row(jnp.concatenate([params["b3"], params["b7"]], axis=1)),
            pad_row(jnp.concatenate([params["b4"], params["b8"]], axis=1)),
        ], axis=0),                                                   # (4, 128)
        "dims": (H, H2),
    }
    return fused


# ---------------------------------------------------------------------------
# Wrapper
# ---------------------------------------------------------------------------
def _round_up(x, m):
    return ((x + m - 1) // m) * m


def _device_kind():
    try:
        return jax.devices()[0].device_kind.lower()
    except Exception:  # pragma: no cover - defensive
        return ""


def critic_forward(state, action, fused):
    """Returns (q1, q2), each (B, 1) float32."""
    B, S = state.shape
    A = action.shape[1]
    SA = S + A
    H, H2 = fused["dims"]

    is_v7 = "v7" in _device_kind()
    # v5e/v6e: 1 TC, 128 MiB VMEM -> biggest tile / fewest grid steps.
    # v7x: 64 MiB VMEM and 2 TCs -> cap tile and keep >= 2 "parallel" steps
    # for large batches so both cores get work.
    max_block_b = 1024 if is_v7 else 2048

    block_b = min(max_block_b, _round_up(B, 8))
    if is_v7 and B >= 1024:
        block_b = min(block_b, _round_up((B + 1) // 2, 8))
    block_b = max(block_b, 8)
    Bp = _round_up(B, block_b)

    # One merged operand; pad only for ragged batches (folded on the concat
    # that layer-1 needs anyway).
    sa = jnp.concatenate([state, action], axis=1)
    if Bp != B:
        sa = jnp.pad(sa, ((0, Bp - B), (0, 0)))

    grid = (Bp // block_b,)

    # Actual VMEM footprint (double-buffered in/out blocks + intermediates +
    # ~0.2 MiB of weights) with ~2x headroom; don't reserve more.
    vmem_limit = int(min(64 * 1024 * 1024,
                         max(4 * 1024 * 1024,
                             block_b * 128 * 4 * 8 + (2 << 20))))

    param_bytes = 4 * sum(int(v.size) for k, v in fused.items() if k != "dims")
    flops = 2 * Bp * (SA * 2 * H + (2 * H) * (2 * H2)
                      + (2 * H2) * (2 * H) + (2 * H) * _OUT_LANES)
    bytes_accessed = 4 * Bp * (SA + _OUT_LANES) + param_bytes

    kernel = functools.partial(_critic_kernel, H=H, H2=H2)

    q = pl.pallas_call(
        kernel,
        out_shape=jax.ShapeDtypeStruct((Bp, _OUT_LANES), jnp.float32),
        grid=grid,
        in_specs=[
            pl.BlockSpec((block_b, SA), lambda i: (i, 0)),            # sa tile
            pl.BlockSpec(tuple(fused["w1"].shape), lambda i: (0, 0)),
            pl.BlockSpec(tuple(fused["w2"].shape), lambda i: (0, 0)),
            pl.BlockSpec(tuple(fused["w3"].shape), lambda i: (0, 0)),
            pl.BlockSpec(tuple(fused["w4"].shape), lambda i: (0, 0)),
            pl.BlockSpec(tuple(fused["bias"].shape), lambda i: (0, 0)),
        ],
        out_specs=pl.BlockSpec((block_b, _OUT_LANES), lambda i: (i, 0)),
        compiler_params=pltpu.CompilerParams(
            dimension_semantics=("parallel",),
            vmem_limit_bytes=vmem_limit,
        ),
        cost_estimate=pl.CostEstimate(
            flops=flops, transcendentals=0, bytes_accessed=bytes_accessed),
    )(sa, fused["w1"], fused["w2"], fused["w3"], fused["w4"], fused["bias"])

    q1 = q[:B, 0:1]
    q2 = q[:B, 1:2]
    return q1, q2


# ---------------------------------------------------------------------------
# Init mirroring the PyTorch module's reset_parameters()
# ---------------------------------------------------------------------------
def init_critic_params(key, state_dim, action_dim, hidden_dim, hidden_dim2):
    """hidden_init uses weight.size(0) == out_features -> lim = 1/sqrt(out);
    biases keep the default nn.Linear U(-1/sqrt(in), 1/sqrt(in))."""
    dims = [
        (state_dim + action_dim, hidden_dim),   # l1
        (hidden_dim, hidden_dim2),              # l2
        (hidden_dim2, hidden_dim),              # l3
        (hidden_dim, 1),                        # l4
        (state_dim + action_dim, hidden_dim),   # l5
        (hidden_dim, hidden_dim2),              # l6
        (hidden_dim2, hidden_dim),              # l7
        (hidden_dim, 1),                        # l8
    ]
    params = {}
    keys = jax.random.split(key, 2 * len(dims))
    for i, (fin, fout) in enumerate(dims):
        w_lim = 1.0 / jnp.sqrt(jnp.float32(fout))
        b_lim = 1.0 / jnp.sqrt(jnp.float32(fin))
        # store weight already transposed to (in, out)
        params[f"w{i + 1}"] = jax.random.uniform(
            keys[2 * i], (fin, fout), jnp.float32, minval=-w_lim, maxval=w_lim)
        params[f"b{i + 1}"] = jax.random.uniform(
            keys[2 * i + 1], (1, fout), jnp.float32, minval=-b_lim, maxval=b_lim)
    return params


# ---------------------------------------------------------------------------
# Pure-JAX reference (unfused) for correctness check
# ---------------------------------------------------------------------------
def _reference_forward(state, action, params):
    sa = jnp.concatenate([state, action], axis=1)
    hp = jax.lax.Precision.HIGHEST

    def lin(x, i):
        return jnp.dot(x, params[f"w{i}"], precision=hp) + params[f"b{i}"]

    h = jax.nn.relu(lin(sa, 1))
    h = jax.nn.relu(lin(h, 2))
    h = jax.nn.relu(lin(h, 3))
    q1 = lin(h, 4)
    g = jax.nn.relu(lin(sa, 5))
    g = jax.nn.relu(lin(g, 6))
    g = jax.nn.relu(lin(g, 7))
    q2 = lin(g, 8)
    return q1, q2


if __name__ == "__main__":
    state_dim, action_dim = 12, 4
    hidden_dim, hidden_dim2 = 32, 16

    key = jax.random.PRNGKey(0)
    k_params, k_state, k_action = jax.random.split(key, 3)

    params = init_critic_params(k_params, state_dim, action_dim,
                                hidden_dim, hidden_dim2)
    fused = fuse_critic_params(params)

    # Main small-shape check (batch = 8)
    batch = 8
    state = jax.random.normal(k_state, (batch, state_dim), jnp.float32)
    action = jax.random.normal(k_action, (batch, action_dim), jnp.float32)

    q1, q2 = critic_forward(state, action, fused)
    jax.block_until_ready((q1, q2))

    r1, r2 = _reference_forward(state, action, params)
    assert q1.shape == (batch, 1) and q2.shape == (batch, 1)
    assert jnp.allclose(q1, r1, atol=1e-4, rtol=1e-4)
    assert jnp.allclose(q2, r2, atol=1e-4, rtol=1e-4)

    # Secondary check exercising the ragged-batch padding path (B not % 8)
    batch2 = 20
    k_s2, k_a2 = jax.random.split(jax.random.PRNGKey(1))
    state2 = jax.random.normal(k_s2, (batch2, state_dim), jnp.float32)
    action2 = jax.random.normal(k_a2, (batch2, action_dim), jnp.float32)
    p1, p2 = critic_forward(state2, action2, fused)
    jax.block_until_ready((p1, p2))
    s1, s2 = _reference_forward(state2, action2, params)
    assert p1.shape == (batch2, 1) and p2.shape == (batch2, 1)
    assert jnp.allclose(p1, s1, atol=1e-4, rtol=1e-4)
    assert jnp.allclose(p2, s2, atol=1e-4, rtol=1e-4)

    print("KERNEL_OK")
</pallas_src>

<mosaic_0001>
module attributes {stable_mosaic.version = 11 : i64} {
  func.func @_critic_kernel(%arg0: i32, %arg1: memref<8x16xf32, #tpu.memory_space<vmem>>, %arg2: memref<16x64xf32, #tpu.memory_space<vmem>>, %arg3: memref<64x32xf32, #tpu.memory_space<vmem>>, %arg4: memref<32x64xf32, #tpu.memory_space<vmem>>, %arg5: memref<64x128xf32, #tpu.memory_space<vmem>>, %arg6: memref<4x128xf32, #tpu.memory_space<vmem>>, %arg7: memref<8x128xf32, #tpu.memory_space<vmem>>) attributes {dimension_semantics = [#tpu.dimension_semantics<parallel>], iteration_bounds = array<i64: 1>, scalar_prefetch = 0 : i64, scratch_operands = 0 : i64, tpu.core_type = #tpu.core_type<tc>, window_params = [{transform_indices = @transform_0, window_bounds = array<i64: 8, 16>}, {pipeline_mode = #tpu.pipeline_mode<synchronous>, transform_indices = @transform_1, window_bounds = array<i64: 16, 64>}, {pipeline_mode = #tpu.pipeline_mode<synchronous>, transform_indices = @transform_2, window_bounds = array<i64: 64, 32>}, {pipeline_mode = #tpu.pipeline_mode<synchronous>, transform_indices = @transform_3, window_bounds = array<i64: 32, 64>}, {pipeline_mode = #tpu.pipeline_mode<synchronous>, transform_indices = @transform_4, window_bounds = array<i64: 64, 128>}, {pipeline_mode = #tpu.pipeline_mode<synchronous>, transform_indices = @transform_5, window_bounds = array<i64: 4, 128>}, {transform_indices = @transform_6, window_bounds = array<i64: 8, 128>}]} {
    %c0 = arith.constant 0 : index
    %c0_0 = arith.constant 0 : index
    %0 = vector.load %arg1[%c0, %c0_0] : memref<8x16xf32, #tpu.memory_space<vmem>>, vector<8x16xf32>
    %c0_1 = arith.constant 0 : index
    %c0_2 = arith.constant 0 : index
    %1 = vector.load %arg2[%c0_1, %c0_2] : memref<16x64xf32, #tpu.memory_space<vmem>>, vector<16x64xf32>
    %cst = arith.constant dense<0.000000e+00> : vector<8x64xf32>
    %2 = tpu.matmul %0, %1, %cst {dimension_numbers = #tpu.dot_dimension_numbers<[1], [0], [0], [1], [0, 0, 1, 1], [], []>} : vector<8x16xf32>, vector<16x64xf32>, vector<8x64xf32> -> vector<8x64xf32>
    %c0_3 = arith.constant 0 : index
    %c0_4 = arith.constant 0 : index
    %3 = vector.load %arg6[%c0_3, %c0_4] : memref<4x128xf32, #tpu.memory_space<vmem>>, vector<1x64xf32>
    %4 = vector.broadcast %3 : vector<1x64xf32> to vector<8x64xf32>
    %5 = arith.addf %2, %4 : vector<8x64xf32>
    %cst_5 = arith.constant 0.000000e+00 : f32
    %6 = vector.broadcast %cst_5 : f32 to vector<8x64xf32>
    %7 = arith.maximumf %5, %6 : vector<8x64xf32>
    %c0_6 = arith.constant 0 : index
    %c0_7 = arith.constant 0 : index
    %8 = vector.load %arg3[%c0_6, %c0_7] : memref<64x32xf32, #tpu.memory_space<vmem>>, vector<64x32xf32>
    %cst_8 = arith.constant dense<0.000000e+00> : vector<8x32xf32>
    %9 = tpu.matmul %7, %8, %cst_8 {dimension_numbers = #tpu.dot_dimension_numbers<[1], [0], [0], [1], [0, 0, 1, 1], [], []>} : vector<8x64xf32>, vector<64x32xf32>, vector<8x32xf32> -> vector<8x32xf32>
    %c1 = arith.constant 1 : index
    %c0_9 = arith.constant 0 : index
    %10 = vector.load %arg6[%c1, %c0_9] : memref<4x128xf32, #tpu.memory_space<vmem>>, vector<1x32xf32>
    %11 = vector.broadcast %10 : vector<1x32xf32> to vector<8x32xf32>
    %12 = arith.addf %9, %11 : vector<8x32xf32>
    %cst_10 = arith.constant 0.000000e+00 : f32
    %13 = vector.broadcast %cst_10 : f32 to vector<8x32xf32>
    %14 = arith.maximumf %12, %13 : vector<8x32xf32>
    %c0_11 = arith.constant 0 : index
    %c0_12 = arith.constant 0 : index
    %15 = vector.load %arg4[%c0_11, %c0_12] : memref<32x64xf32, #tpu.memory_space<vmem>>, vector<32x64xf32>
    %cst_13 = arith.constant dense<0.000000e+00> : vector<8x64xf32>
    %16 = tpu.matmul %14, %15, %cst_13 {dimension_numbers = #tpu.dot_dimension_numbers<[1], [0], [0], [1], [0, 0, 1, 1], [], []>} : vector<8x32xf32>, vector<32x64xf32>, vector<8x64xf32> -> vector<8x64xf32>
    %c2 = arith.constant 2 : index
    %c0_14 = arith.constant 0 : index
    %17 = vector.load %arg6[%c2, %c0_14] : memref<4x128xf32, #tpu.memory_space<vmem>>, vector<1x64xf32>
    %18 = vector.broadcast %17 : vector<1x64xf32> to vector<8x64xf32>
    %19 = arith.addf %16, %18 : vector<8x64xf32>
    %cst_15 = arith.constant 0.000000e+00 : f32
    %20 = vector.broadcast %cst_15 : f32 to vector<8x64xf32>
    %21 = arith.maximumf %19, %20 : vector<8x64xf32>
    %c0_16 = arith.constant 0 : index
    %c0_17 = arith.constant 0 : index
    %22 = vector.load %arg5[%c0_16, %c0_17] : memref<64x128xf32, #tpu.memory_space<vmem>>, vector<64x128xf32>
    %cst_18 = arith.constant dense<0.000000e+00> : vector<8x128xf32>
    %23 = tpu.matmul %21, %22, %cst_18 {dimension_numbers = #tpu.dot_dimension_numbers<[1], [0], [0], [1], [0, 0, 1, 1], [], []>} : vector<8x64xf32>, vector<64x128xf32>, vector<8x128xf32> -> vector<8x128xf32>
    %c3 = arith.constant 3 : index
    %c0_19 = arith.constant 0 : index
    %24 = vector.load %arg6[%c3, %c0_19] : memref<4x128xf32, #tpu.memory_space<vmem>>, vector<1x128xf32>
    %25 = vector.broadcast %24 : vector<1x128xf32> to vector<8x128xf32>
    %26 = arith.addf %23, %25 : vector<8x128xf32>
    %c0_20 = arith.constant 0 : index
    %c0_21 = arith.constant 0 : index
    %27 = vector.load %arg7[%c0_20, %c0_21] : memref<8x128xf32, #tpu.memory_space<vmem>>, vector<8x128xf32>
    tpu.vector_store %arg7[%c0_20, %c0_21], %26 {strides = array<i32>} : memref<8x128xf32, #tpu.memory_space<vmem>>, vector<8x128xf32>,
    return
  }
  func.func @transform_0(%arg0: i32) -> (i32, i32) {
    %c0_i32 = arith.constant 0 : i32
    %c0_i32_0 = arith.constant 0 : i32
    return %arg0, %c0_i32 : i32, i32
  }
  func.func @transform_1(%arg0: i32) -> (i32, i32) {
    %c0_i32 = arith.constant 0 : i32
    %c0_i32_0 = arith.constant 0 : i32
    %c0_i32_1 = arith.constant 0 : i32
    return %c0_i32, %c0_i32_0 : i32, i32
  }
  func.func @transform_2(%arg0: i32) -> (i32, i32) {
    %c0_i32 = arith.constant 0 : i32
    %c0_i32_0 = arith.constant 0 : i32
    %c0_i32_1 = arith.constant 0 : i32
    return %c0_i32, %c0_i32_0 : i32, i32
  }
  func.func @transform_3(%arg0: i32) -> (i32, i32) {
    %c0_i32 = arith.constant 0 : i32
    %c0_i32_0 = arith.constant 0 : i32
    %c0_i32_1 = arith.constant 0 : i32
    return %c0_i32, %c0_i32_0 : i32, i32
  }
  func.func @transform_4(%arg0: i32) -> (i32, i32) {
    %c0_i32 = arith.constant 0 : i32
    %c0_i32_0 = arith.constant 0 : i32
    %c0_i32_1 = arith.constant 0 : i32
    return %c0_i32, %c0_i32_0 : i32, i32
  }
  func.func @transform_5(%arg0: i32) -> (i32, i32) {
    %c0_i32 = arith.constant 0 : i32
    %c0_i32_0 = arith.constant 0 : i32
    %c0_i32_1 = arith.constant 0 : i32
    return %c0_i32, %c0_i32_0 : i32, i32
  }
  func.func @transform_6(%arg0: i32) -> (i32, i32) {
    %c0_i32 = arith.constant 0 : i32
    %c0_i32_0 = arith.constant 0 : i32
    return %arg0, %c0_i32 : i32, i32
  }
}

</mosaic_0001>

<llo_original>
// kernel: tpu_custom_call.1
$region0: #{tpu_custom_call.1}
  #allocation0 [shape = 'u32[]', space=smem, size = 0x4, offset = 0x4, fixed_abs, tag = 'smem constant byte address 0x4 - core index']
  #allocation1 [shape = 'u32[144,128]{1,0:T(1,128)}', space=vmem, size = 0x12000, scoped, tag = 'internal scratch']
  %s0 = inlined_call_operand.vmem [shape: f32[8,16], index: 0, kind: input, shape index: {}]
  %s1 = inlined_call_operand.hbm [shape: f32[16,64], index: 1, kind: input, shape index: {}]
  %s2 = inlined_call_operand.vmem [shape: f32[64,32], index: 2, kind: input, shape index: {}]
  %s3 = inlined_call_operand.vmem [shape: f32[32,64], index: 3, kind: input, shape index: {}]
  %s4 = inlined_call_operand.vmem [shape: f32[64,128], index: 4, kind: input, shape index: {}]
  %s5 = inlined_call_operand.vmem [shape: f32[4,128], index: 5, kind: input, shape index: {}]
  %s6 = inlined_call_operand.hbm [shape: f32[8,128], index: 6, kind: output, shape index: {}]
  %s7 = sld [smem:[#allocation0]]
  $region38: #{tpu_custom_call.1} parent=0
    _
  %s9 = ssub.s32 1, %s7
  %s10 = scalar_select 0, %s9, %s7
  $region1: #{tpu_custom_call.1} parent=0
    #allocation2 [shape = 'u8[8192]{0}', space=vmem, size = 0x2000, scoped, tag = 'input window, operand 1, single buffered']
    #allocation3 [shape = 's32[1]{0}', space=sflag, size = 0x4, scoped, tag = 'scoped memory for tpu_custom_call.1']
    #allocation4 [shape = 's32[1]{0}', space=sflag, size = 0x4, scoped, tag = 'scoped memory for tpu_custom_call.1']
    #allocation5 [shape = 'u8[4096]{0}', space=vmem, size = 0x1000, scoped, tag = 'output window, operand 0, single buffered']
    %11 = vsyncpa [#allocation3], 0
    %12 = vsyncpa [#allocation4], 0
    // Predicated region
    $region2: #{tpu_custom_call.1} parent=1 // pred_check
      _
    $region3: #{tpu_custom_call.1} parent=1 // pred_check_branch
      %14 = sbr.rel (0) target = $region5
    $region4: #{tpu_custom_call.1} parent=1 // pred_region
      _
    $region5: #{tpu_custom_call.1} parent=1 // pred_fallthru
      _
    // Predicated region
    $region6: #{tpu_custom_call.1} parent=1 // pred_check
      _
    $region7: #{tpu_custom_call.1} parent=1 // pred_check_branch
      %16 = sbr.rel (0) target = $region9
    $region8: #{tpu_custom_call.1} parent=1 // pred_region
      %s18 = ssub.s32 256, 256
      %19 = vsyncadd [#allocation3], %s18
      %s20 = sshll.u32 [#allocation2], 4
      %s21 = int_to_ptr.vmem [resolvable:$true] %s20
      %26 = dma.hbm_to_vmem [thread:$0]  %s1, 256, %s21, [#allocation3], 128, 128, 8
    $region9: #{tpu_custom_call.1} parent=1 // pred_fallthru
      _
    // Predicated region
    $region10: #{tpu_custom_call.1} parent=1 // pred_check
      _
    $region11: #{tpu_custom_call.1} parent=1 // pred_check_branch
      %28 = sbr.rel (0) target = $region13
    $region12: #{tpu_custom_call.1} parent=1 // pred_region
      _
    $region13: #{tpu_custom_call.1} parent=1 // pred_fallthru
      _
    // Predicated region
    $region14: #{tpu_custom_call.1} parent=1 // pred_check
      _
    $region15: #{tpu_custom_call.1} parent=1 // pred_check_branch
      %30 = sbr.rel (0) target = $region17
    $region16: #{tpu_custom_call.1} parent=1 // pred_region
      _
    $region17: #{tpu_custom_call.1} parent=1 // pred_fallthru
      _
    // Predicated region
    $region18: #{tpu_custom_call.1} parent=1 // pred_check
      _
    $region19: #{tpu_custom_call.1} parent=1 // pred_check_branch
      %32 = sbr.rel (0) target = $region21
    $region20: #{tpu_custom_call.1} parent=1 // pred_region
      _
    $region21: #{tpu_custom_call.1} parent=1 // pred_fallthru
      _
    // Predicated region
    $region22: #{tpu_custom_call.1} parent=1 // pred_check
      _
    $region23: #{tpu_custom_call.1} parent=1 // pred_check_branch
      %34 = sbr.rel (0) target = $region25
    $region24: #{tpu_custom_call.1} parent=1 // pred_region
      _
    $region25: #{tpu_custom_call.1} parent=1 // pred_fallthru
      _
    // Predicated region
    $region26: #{tpu_custom_call.1} parent=1 // pred_check
      _
    $region27: #{tpu_custom_call.1} parent=1 // pred_check_branch
      %36 = sbr.rel (0) target = $region29
    $region28: #{tpu_custom_call.1} parent=1 // pred_region
      %37 = dma.done [#allocation3], 256
    $region29: #{tpu_custom_call.1} parent=1 // pred_fallthru
      _
    %v38 = vld [vmem:[%s0] sm:$0xff]
    %v39 = vld [vmem:[#allocation2] sm:$0xff]
    %v40 = vld [vmem:[#allocation2 + $0x8] sm:$0xff]
    %v41 = vld [vmem:[%s5] sm:$0x1]
    %v42 = vlaneseq
    %v43 = vshrl.u32 %v42, 7
    %v44 = vsub.s32 0, %v43
    %v45 = vrot.slane %v41, %v44
    %vm46 = vcmask 130048
    %v48 = vsel %vm46, %v38, 0
    %50 = vmatprep.subr.mxu0 0.0
    %51 = vmatpush1.msra.mxu0 %v39
    %52 = vmatprep.subr.mxu0 0.0
    %53 = vmatpush1.msra.mxu0 %v40
    %54 = vmatprep.subr.mxu0 0.0
    %55 = vmatpush1.msra.mxu0 0.0
    %56 = vmatprep.subr.mxu0 0.0
    %57 = vmatpush1.msra.mxu0 0.0
    %58 = vmatprep.subr.mxu0 0.0
    %59 = vmatpush1.msra.mxu0 0.0
    %60 = vmatprep.subr.mxu0 0.0
    %61 = vmatpush1.msra.mxu0 0.0
    %62 = vmatprep.subr.mxu0 0.0
    %63 = vmatpush1.msra.mxu0 0.0
    %64 = vmatprep.subr.mxu0 0.0
    %65 = vmatpush1.msra.mxu0 0.0
    %66 = vmatprep.subr.mxu0 0.0
    %67 = vmatpush1.msra.mxu0 0.0
    %68 = vmatprep.subr.mxu0 0.0
    %69 = vmatpush1.msra.mxu0 0.0
    %70 = vmatprep.subr.mxu0 0.0
    %71 = vmatpush1.msra.mxu0 0.0
    %72 = vmatprep.subr.mxu0 0.0
    %73 = vmatpush1.msra.mxu0 0.0
    %74 = vmatprep.subr.mxu0 0.0
    %75 = vmatpush1.msra.mxu0 0.0
    %76 = vmatprep.subr.mxu0 0.0
    %77 = vmatpush1.msra.mxu0 0.0
    %78 = vmatprep.subr.mxu0 0.0
    %79 = vmatpush1.msra.mxu0 0.0
    %80 = vmatprep.subr.mxu0 0.0
    %81 = vmatpush1.msra.mxu0 0.0
    %82 = vmatprep.subr.mxu0 0.0
    %83 = vmatpush1.msra.mxu0 0.0
    %84 = vmatprep.subr.mxu0 0.0
    %85 = vmatpush1.msra.mxu0 0.0
    %86 = vmatprep.subr.mxu0 0.0
    %87 = vmatpush1.msra.mxu0 0.0
    %88 = vmatprep.subr.mxu0 0.0
    %89 = vmatpush1.msra.mxu0 0.0
    %90 = vmatprep.subr.mxu0 0.0
    %91 = vmatpush1.msra.mxu0 0.0
    %92 = vmatprep.subr.mxu0 0.0
    %93 = vmatpush1.msra.mxu0 0.0
    %94 = vmatprep.subr.mxu0 0.0
    %95 = vmatpush1.msra.mxu0 0.0
    %96 = vmatprep.subr.mxu0 0.0
    %97 = vmatpush1.msra.mxu0 0.0
    %98 = vmatprep.subr.mxu0 0.0
    %99 = vmatpush1.msra.mxu0 0.0
    %100 = vmatprep.subr.mxu0 0.0
    %101 = vmatpush1.msra.mxu0 0.0
    %102 = vmatprep.subr.mxu0 0.0
    %103 = vmatpush1.msra.mxu0 0.0
    %104 = vmatprep.subr.mxu0 0.0
    %105 = vmatpush1.msra.mxu0 0.0
    %106 = vmatprep.subr.mxu0 0.0
    %107 = vmatpush1.msra.mxu0 0.0
    %108 = vmatprep.subr.mxu0 0.0
    %109 = vmatpush1.msra.mxu0 0.0
    %110 = vmatprep.subr.mxu0 0.0
    %111 = vmatpush1.msra.mxu0 0.0
    %112 = vmatprep.subr.mxu0 0.0
    %113 = vmatpush1.msra.mxu0 0.0
    %114 = vmatprep.mubr.f32.mxu0 0.0
    %115 = vmatmul.mubr.f32.gmra.mrb[0].mxu0 %v48
    %v116 = vpop.f32.mrb[0].mxu0
    %v117 = vadd.f32 %v45, %v116
    %v118 = vpop.f32.mrb[0].mxu0
    %119 = vdwg.mxu0
    %v120 = vmax.f32 %v117, 0.0
    %v121 = vld [vmem:[%s2] sm:$0xff]
    %v122 = vld [vmem:[%s2 + $0x8] sm:$0xff]
    %v123 = vld [vmem:[%s2 + $0x10] sm:$0xff]
    %v124 = vld [vmem:[%s2 + $0x18] sm:$0xff]
    %v125 = vld [vmem:[%s2 + $0x20] sm:$0xff]
    %v126 = vld [vmem:[%s2 + $0x28] sm:$0xff]
    %v127 = vld [vmem:[%s2 + $0x30] sm:$0xff]
    %v128 = vld [vmem:[%s2 + $0x38] sm:$0xff]
    %v129 = vld [vmem:[%s5 + $0x1] sm:$0x1]
    %v130 = vlaneseq
    %v131 = vshrl.u32 %v130, 7
    %v132 = vsub.s32 0, %v131
    %v133 = vrot.slane %v129, %v132
    %vm134 = vcmask 523264
    %v136 = vsel %vm134, %v120, 0
    %138 = vmatprep.subr.mxu0 0.0
    %139 = vmatpush1.msra.mxu0 %v121
    %140 = vmatprep.subr.mxu0 0.0
    %141 = vmatpush1.msra.mxu0 %v122
    %142 = vmatprep.subr.mxu0 0.0
    %143 = vmatpush1.msra.mxu0 %v123
    %144 = vmatprep.subr.mxu0 0.0
    %145 = vmatpush1.msra.mxu0 %v124
    %146 = vmatprep.subr.mxu0 0.0
    %147 = vmatpush1.msra.mxu0 %v125
    %148 = vmatprep.subr.mxu0 0.0
    %149 = vmatpush1.msra.mxu0 %v126
    %150 = vmatprep.subr.mxu0 0.0
    %151 = vmatpush1.msra.mxu0 %v127
    %152 = vmatprep.subr.mxu0 0.0
    %153 = vmatpush1.msra.mxu0 %v128
    %154 = vmatprep.subr.mxu0 0.0
    %155 = vmatpush1.msra.mxu0 0.0
    %156 = vmatprep.subr.mxu0 0.0
    %157 = vmatpush1.msra.mxu0 0.0
    %158 = vmatprep.subr.mxu0 0.0
    %159 = vmatpush1.msra.mxu0 0.0
    %160 = vmatprep.subr.mxu0 0.0
    %161 = vmatpush1.msra.mxu0 0.0
    %162 = vmatprep.subr.mxu0 0.0
    %163 = vmatpush1.msra.mxu0 0.0
    %164 = vmatprep.subr.mxu0 0.0
    %165 = vmatpush1.msra.mxu0 0.0
    %166 = vmatprep.subr.mxu0 0.0
    %167 = vmatpush1.msra.mxu0 0.0
    %168 = vmatprep.subr.mxu0 0.0
    %169 = vmatpush1.msra.mxu0 0.0
    %170 = vmatprep.subr.mxu0 0.0
    %171 = vmatpush1.msra.mxu0 0.0
    %172 = vmatprep.subr.mxu0 0.0
    %173 = vmatpush1.msra.mxu0 0.0
    %174 = vmatprep.subr.mxu0 0.0
    %175 = vmatpush1.msra.mxu0 0.0
    %176 = vmatprep.subr.mxu0 0.0
    %177 = vmatpush1.msra.mxu0 0.0
    %178 = vmatprep.subr.mxu0 0.0
    %179 = vmatpush1.msra.mxu0 0.0
    %180 = vmatprep.subr.mxu0 0.0
    %181 = vmatpush1.msra.mxu0 0.0
    %182 = vmatprep.subr.mxu0 0.0
    %183 = vmatpush1.msra.mxu0 0.0
    %184 = vmatprep.subr.mxu0 0.0
    %185 = vmatpush1.msra.mxu0 0.0
    %186 = vmatprep.subr.mxu0 0.0
    %187 = vmatpush1.msra.mxu0 0.0
    %188 = vmatprep.subr.mxu0 0.0
    %189 = vmatpush1.msra.mxu0 0.0
    %190 = vmatprep.subr.mxu0 0.0
    %191 = vmatpush1.msra.mxu0 0.0
    %192 = vmatprep.subr.mxu0 0.0
    %193 = vmatpush1.msra.mxu0 0.0
    %194 = vmatprep.subr.mxu0 0.0
    %195 = vmatpush1.msra.mxu0 0.0
    %196 = vmatprep.subr.mxu0 0.0
    %197 = vmatpush1.msra.mxu0 0.0
    %198 = vmatprep.subr.mxu0 0.0
    %199 = vmatpush1.msra.mxu0 0.0
    %200 = vmatprep.subr.mxu0 0.0
    %201 = vmatpush1.msra.mxu0 0.0
    %202 = vmatprep.mubr.f32.mxu0 0.0
    %203 = vmatmul.mubr.f32.gmra.mrb[0].mxu0 %v136
    %v204 = vpop.f32.mrb[0].mxu0
    %v205 = vadd.f32 %v133, %v204
    %v206 = vpop.f32.mrb[0].mxu0
    %207 = vdwg.mxu0
    %v208 = vmax.f32 %v205, 0.0
    %v209 = vld [vmem:[%s3] sm:$0xff]
    %v210 = vld [vmem:[%s3 + $0x8] sm:$0xff]
    %v211 = vld [vmem:[%s3 + $0x10] sm:$0xff]
    %v212 = vld [vmem:[%s3 + $0x18] sm:$0xff]
    %v213 = vld [vmem:[%s5 + $0x2] sm:$0x1]
    %v214 = vlaneseq
    %v215 = vshrl.u32 %v214, 7
    %v216 = vsub.s32 0, %v215
    %v217 = vrot.slane %v213, %v216
    %vm218 = vcmask 261120
    %v220 = vsel %vm218, %v208, 0
    %222 = vmatprep.subr.mxu0 0.0
    %223 = vmatpush1.msra.mxu0 %v209
    %224 = vmatprep.subr.mxu0 0.0
    %225 = vmatpush1.msra.mxu0 %v210
    %226 = vmatprep.subr.mxu0 0.0
    %227 = vmatpush1.msra.mxu0 %v211
    %228 = vmatprep.subr.mxu0 0.0
    %229 = vmatpush1.msra.mxu0 %v212
    %230 = vmatprep.subr.mxu0 0.0
    %231 = vmatpush1.msra.mxu0 0.0
    %232 = vmatprep.subr.mxu0 0.0
    %233 = vmatpush1.msra.mxu0 0.0
    %234 = vmatprep.subr.mxu0 0.0
    %235 = vmatpush1.msra.mxu0 0.0
    %236 = vmatprep.subr.mxu0 0.0
    %237 = vmatpush1.msra.mxu0 0.0
    %238 = vmatprep.subr.mxu0 0.0
    %239 = vmatpush1.msra.mxu0 0.0
    %240 = vmatprep.subr.mxu0 0.0
    %241 = vmatpush1.msra.mxu0 0.0
    %242 = vmatprep.subr.mxu0 0.0
    %243 = vmatpush1.msra.mxu0 0.0
    %244 = vmatprep.subr.mxu0 0.0
    %245 = vmatpush1.msra.mxu0 0.0
    %246 = vmatprep.subr.mxu0 0.0
    %247 = vmatpush1.msra.mxu0 0.0
    %248 = vmatprep.subr.mxu0 0.0
    %249 = vmatpush1.msra.mxu0 0.0
    %250 = vmatprep.subr.mxu0 0.0
    %251 = vmatpush1.msra.mxu0 0.0
    %252 = vmatprep.subr.mxu0 0.0
    %253 = vmatpush1.msra.mxu0 0.0
    %254 = vmatprep.subr.mxu0 0.0
    %255 = vmatpush1.msra.mxu0 0.0
    %256 = vmatprep.subr.mxu0 0.0
    %257 = vmatpush1.msra.mxu0 0.0
    %258 = vmatprep.subr.mxu0 0.0
    %259 = vmatpush1.msra.mxu0 0.0
    %260 = vmatprep.subr.mxu0 0.0
    %261 = vmatpush1.msra.mxu0 0.0
    %262 = vmatprep.subr.mxu0 0.0
    %263 = vmatpush1.msra.mxu0 0.0
    %264 = vmatprep.subr.mxu0 0.0
    %265 = vmatpush1.msra.mxu0 0.0
    %266 = vmatprep.subr.mxu0 0.0
    %267 = vmatpush1.msra.mxu0 0.0
    %268 = vmatprep.subr.mxu0 0.0
    %269 = vmatpush1.msra.mxu0 0.0
    %270 = vmatprep.subr.mxu0 0.0
    %271 = vmatpush1.msra.mxu0 0.0
    %272 = vmatprep.subr.mxu0 0.0
    %273 = vmatpush1.msra.mxu0 0.0
    %274 = vmatprep.subr.mxu0 0.0
    %275 = vmatpush1.msra.mxu0 0.0
    %276 = vmatprep.subr.mxu0 0.0
    %277 = vmatpush1.msra.mxu0 0.0
    %278 = vmatprep.subr.mxu0 0.0
    %279 = vmatpush1.msra.mxu0 0.0
    %280 = vmatprep.subr.mxu0 0.0
    %281 = vmatpush1.msra.mxu0 0.0
    %282 = vmatprep.subr.mxu0 0.0
    %283 = vmatpush1.msra.mxu0 0.0
    %284 = vmatprep.subr.mxu0 0.0
    %285 = vmatpush1.msra.mxu0 0.0
    %286 = vmatprep.mubr.f32.mxu0 0.0
    %287 = vmatmul.mubr.f32.gmra.mrb[0].mxu0 %v220
    %v288 = vpop.f32.mrb[0].mxu0
    %v289 = vadd.f32 %v217, %v288
    %v290 = vpop.f32.mrb[0].mxu0
    %291 = vdwg.mxu0
    %v292 = vmax.f32 %v289, 0.0
    %v293 = vld [vmem:[%s4] sm:$0xff]
    %v294 = vld [vmem:[%s4 + $0x8] sm:$0xff]
    %v295 = vld [vmem:[%s4 + $0x10] sm:$0xff]
    %v296 = vld [vmem:[%s4 + $0x18] sm:$0xff]
    %v297 = vld [vmem:[%s4 + $0x20] sm:$0xff]
    %v298 = vld [vmem:[%s4 + $0x28] sm:$0xff]
    %v299 = vld [vmem:[%s4 + $0x30] sm:$0xff]
    %v300 = vld [vmem:[%s4 + $0x38] sm:$0xff]
    %v301 = vld [vmem:[%s5 + $0x3] sm:$0x1]
    %v302 = vlaneseq
    %v303 = vshrl.u32 %v302, 7
    %v304 = vsub.s32 0, %v303
    %v305 = vrot.slane %v301, %v304
    %v307 = vsel %vm134, %v292, 0
    %309 = vmatprep.subr.mxu0 0.0
    %310 = vmatpush1.msra.mxu0 %v293
    %311 = vmatprep.subr.mxu0 0.0
    %312 = vmatpush1.msra.mxu0 %v294
    %313 = vmatprep.subr.mxu0 0.0
    %314 = vmatpush1.msra.mxu0 %v295
    %315 = vmatprep.subr.mxu0 0.0
    %316 = vmatpush1.msra.mxu0 %v296
    %317 = vmatprep.subr.mxu0 0.0
    %318 = vmatpush1.msra.mxu0 %v297
    %319 = vmatprep.subr.mxu0 0.0
    %320 = vmatpush1.msra.mxu0 %v298
    %321 = vmatprep.subr.mxu0 0.0
    %322 = vmatpush1.msra.mxu0 %v299
    %323 = vmatprep.subr.mxu0 0.0
    %324 = vmatpush1.msra.mxu0 %v300
    %325 = vmatprep.subr.mxu0 0.0
    %326 = vmatpush1.msra.mxu0 0.0
    %327 = vmatprep.subr.mxu0 0.0
    %328 = vmatpush1.msra.mxu0 0.0
    %329 = vmatprep.subr.mxu0 0.0
    %330 = vmatpush1.msra.mxu0 0.0
    %331 = vmatprep.subr.mxu0 0.0
    %332 = vmatpush1.msra.mxu0 0.0
    %333 = vmatprep.subr.mxu0 0.0
    %334 = vmatpush1.msra.mxu0 0.0
    %335 = vmatprep.subr.mxu0 0.0
    %336 = vmatpush1.msra.mxu0 0.0
    %337 = vmatprep.subr.mxu0 0.0
    %338 = vmatpush1.msra.mxu0 0.0
    %339 = vmatprep.subr.mxu0 0.0
    %340 = vmatpush1.msra.mxu0 0.0
    %341 = vmatprep.subr.mxu0 0.0
    %342 = vmatpush1.msra.mxu0 0.0
    %343 = vmatprep.subr.mxu0 0.0
    %344 = vmatpush1.msra.mxu0 0.0
    %345 = vmatprep.subr.mxu0 0.0
    %346 = vmatpush1.msra.mxu0 0.0
    %347 = vmatprep.subr.mxu0 0.0
    %348 = vmatpush1.msra.mxu0 0.0
    %349 = vmatprep.subr.mxu0 0.0
    %350 = vmatpush1.msra.mxu0 0.0
    %351 = vmatprep.subr.mxu0 0.0
    %352 = vmatpush1.msra.mxu0 0.0
    %353 = vmatprep.subr.mxu0 0.0
    %354 = vmatpush1.msra.mxu0 0.0
    %355 = vmatprep.subr.mxu0 0.0
    %356 = vmatpush1.msra.mxu0 0.0
    %357 = vmatprep.subr.mxu0 0.0
    %358 = vmatpush1.msra.mxu0 0.0
    %359 = vmatprep.subr.mxu0 0.0
    %360 = vmatpush1.msra.mxu0 0.0
    %361 = vmatprep.subr.mxu0 0.0
    %362 = vmatpush1.msra.mxu0 0.0
    %363 = vmatprep.subr.mxu0 0.0
    %364 = vmatpush1.msra.mxu0 0.0
    %365 = vmatprep.subr.mxu0 0.0
    %366 = vmatpush1.msra.mxu0 0.0
    %367 = vmatprep.subr.mxu0 0.0
    %368 = vmatpush1.msra.mxu0 0.0
    %369 = vmatprep.subr.mxu0 0.0
    %370 = vmatpush1.msra.mxu0 0.0
    %371 = vmatprep.subr.mxu0 0.0
    %372 = vmatpush1.msra.mxu0 0.0
    %373 = vmatprep.mubr.f32.mxu0 0.0
    %374 = vmatmul.mubr.f32.gmra.mrb[0].mxu0 %v307
    %v375 = vpop.f32.mrb[0].mxu0
    %v376 = vadd.f32 %v305, %v375
    %v377 = vpop.f32.mrb[0].mxu0
    %378 = vdwg.mxu0
    %379 = vst [vmem:[#allocation5] sm:$0xff] %v376
    // Predicated region
    $region30: #{tpu_custom_call.1} parent=1 // pred_check
      _
    $region31: #{tpu_custom_call.1} parent=1 // pred_check_branch
      %381 = sbr.rel (0) target = $region33
    $region32: #{tpu_custom_call.1} parent=1 // pred_region
      %s383 = ssub.s32 128, 128
      %384 = vsyncadd [#allocation4], %s383
      %s386 = sshll.u32 [#allocation5], 4
      %s387 = int_to_ptr.vmem [resolvable:$true] %s386
      %389 = dma.vmem_to_hbm [thread:$0]  %s387, 128, %s6, [#allocation4]
    $region33: #{tpu_custom_call.1} parent=1 // pred_fallthru
      _
    // Predicated region
    $region34: #{tpu_custom_call.1} parent=1 // pred_check
      _
    $region35: #{tpu_custom_call.1} parent=1 // pred_check_branch
      %391 = sbr.rel (0) target = $region37
    $region36: #{tpu_custom_call.1} parent=1 // pred_region
      %392 = dma.done [#allocation4], 128
    $region37: #{tpu_custom_call.1} parent=1 // pred_fallthru
      _
    %393 = vsyncpa [#allocation3], 1
    %394 = vsyncpa [#allocation4], 1

</llo_original>
